<compile_context>
chip_gen: v7x
topology: tpu7x:2x2x1
jax: 0.10.0
libtpu: 0.0.40
codegen_flags: <defaults>
</compile_context>

<pallas_src>
import functools

import jax
import jax.numpy as jnp
from jax.experimental import pallas as pl
from jax.experimental.pallas import tpu as pltpu


def _round_up(x: int, m: int) -> int:
    return ((x + m - 1) // m) * m


def _vmem_budget_bytes():
    """Generation-aware (budget_for_tiles, mosaic_vmem_limit) in bytes."""
    cap = 64 * 1024 * 1024  # conservative default = v7x per-TensorCore VMEM
    try:
        cap = int(getattr(pltpu.get_tpu_info(), "vmem_capacity_bytes", cap))
    except Exception:  # pragma: no cover - interpret mode / older runtimes
        pass
    limit = int(cap * 0.8)                       # headroom for Mosaic internals
    budget = max(limit - 8 * 1024 * 1024, 16 * 1024 * 1024)
    return budget, limit


def _choose_tiles(n_pad: int, f_pad: int, in_bytes: int, budget: int):
    """Largest (tm, tk) adjacency block dividing n_pad that fits VMEM.

    Prefer large tm first (support re-stream is ~f_pad/tm of the adjacency
    bytes), then large tk (bigger contiguous DMA bursts / fewer grid steps).
    """
    def fits(tm, tk):
        need = (2 * tm * tk * in_bytes          # adj blocks (double-buffered)
                + 2 * tk * f_pad * in_bytes     # support blocks (double-buffered)
                + 2 * tm * f_pad * 4            # output tiles (double-buffered)
                + tm * f_pad * 4                # f32 accumulator scratch
                + 2 * f_pad * 4)                # bias
        return need <= budget

    tms = [t for t in (1024, 512, 256, 128) if n_pad % t == 0]
    multi = [t for t in tms if n_pad // t >= 2]  # >=2 row slabs -> both TCs (v7x)
    if multi:
        tms = multi
    tks = [t for t in (4096, 2048, 1024, 512, 256, 128) if n_pad % t == 0]
    for tm in tms:
        for tk in tks:
            if fits(tm, tk):
                return tm, tk
    # TODO(synk): also tile f_out when f_pad alone busts the VMEM budget.
    return 128, 128


# --------------------------------------------------------------------------
# Kernels
# --------------------------------------------------------------------------
def _fused_kernel(x_ref, w_ref, adj_ref, b_ref, o_ref):
    # Small-graph path: support and the adjacency matmul in one VMEM-resident call.
    support = jnp.dot(x_ref[...], w_ref[...], preferred_element_type=jnp.float32)
    acc = jnp.dot(adj_ref[...], support.astype(adj_ref.dtype),
                  preferred_element_type=jnp.float32)
    o_ref[...] = jnp.maximum(acc + b_ref[...], 0.0).astype(o_ref.dtype)


def _support_kernel(x_ref, w_ref, s_ref):
    # One (tm_s, f_in_pad) row slab of X against the resident weight.
    s_ref[...] = jnp.dot(x_ref[...], w_ref[...],
                         preferred_element_type=jnp.float32).astype(s_ref.dtype)


def _adj_matmul_kernel(adj_ref, s_ref, b_ref, o_ref, acc_ref):
    # output[i] = relu(sum_k A[i, k] @ support[k] + bias); f32 accumulation.
    k = pl.program_id(1)

    @pl.when(k == 0)
    def _():
        acc_ref[...] = jnp.zeros_like(acc_ref)

    acc_ref[...] += jnp.dot(adj_ref[...], s_ref[...],
                            preferred_element_type=jnp.float32)

    @pl.when(k == pl.num_programs(1) - 1)
    def _():
        o_ref[...] = jnp.maximum(acc_ref[...] + b_ref[...], 0.0).astype(o_ref.dtype)


# --------------------------------------------------------------------------
# Wrapper
# --------------------------------------------------------------------------
@functools.partial(jax.jit, static_argnames=("use_bf16",))
def gcn_conv_reg(x, adj, weight, bias, use_bf16: bool = True):
    """Pallas implementation of GCNConv_reg.forward(input, adj)."""
    n, f_in = x.shape
    f_out = weight.shape[1]

    in_dtype = jnp.bfloat16 if use_bf16 else jnp.float32
    in_bytes = 2 if use_bf16 else 4

    f_in_pad = _round_up(f_in, 128)
    f_pad = _round_up(f_out, 128)
    budget, vmem_limit = _vmem_budget_bytes()

    # Cheap padded copies of the small operands (adj handled per-path below).
    def pad_xwb(n_pad):
        x_p = jnp.pad(x.astype(jnp.float32),
                      ((0, n_pad - n), (0, f_in_pad - f_in)))
        w_p = jnp.pad(weight.astype(jnp.float32),
                      ((0, f_in_pad - f_in), (0, f_pad - f_out)))
        b_p = jnp.pad(bias.astype(jnp.float32),
                      ((0, f_pad - f_out),)).reshape(1, f_pad)
        return x_p, w_p, b_p

    def pad_adj(n_pad):
        adj_p = adj.astype(in_dtype)            # bf16 cast fused into this one copy
        if n_pad != n:
            adj_p = jnp.pad(adj_p, ((0, n_pad - n), (0, n_pad - n)))
        return adj_p

    n_pad = _round_up(n, 128)

    # ---------------- Small-graph fused path ----------------
    small_bytes = (n_pad * n_pad * in_bytes
                   + n_pad * f_in_pad * 4
                   + n_pad * f_pad * (4 + in_bytes)
                   + f_in_pad * f_pad * 4)
    if n_pad <= 1024 and small_bytes <= min(budget, 16 * 1024 * 1024):
        x_p, w_p, b_p = pad_xwb(n_pad)
        out_p = pl.pallas_call(
            _fused_kernel,
            out_shape=jax.ShapeDtypeStruct((n_pad, f_pad), jnp.float32),
            compiler_params=pltpu.CompilerParams(vmem_limit_bytes=vmem_limit),
        )(x_p, w_p, pad_adj(n_pad), b_p)
        return out_p[:n, :f_out].astype(x.dtype)

    # ---------------- Large-graph tiled path ----------------
    tm, tk = _choose_tiles(n_pad, f_pad, in_bytes, budget)
    x_p, w_p, b_p = pad_xwb(n_pad)
    adj_p = pad_adj(n_pad)

    # Stage 1: support = X @ W, row-tiled (tiny next to the adjacency stream).
    # TODO(synk): tile f_in as well if the resident weight ever busts VMEM.
    tm_s = tm
    for cand in (tm, 512, 256, 128):
        need = (2 * cand * f_in_pad * 4 + 2 * f_in_pad * f_pad * 4
                + 2 * cand * f_pad * 4)
        if n_pad % cand == 0 and need <= budget:
            tm_s = cand
            break

    support = pl.pallas_call(
        _support_kernel,
        out_shape=jax.ShapeDtypeStruct((n_pad, f_pad), in_dtype),
        grid_spec=pltpu.PrefetchScalarGridSpec(
            num_scalar_prefetch=0,
            grid=(n_pad // tm_s,),
            in_specs=[pl.BlockSpec((tm_s, f_in_pad), lambda i: (i, 0)),
                      pl.BlockSpec((f_in_pad, f_pad), lambda i: (0, 0))],
            out_specs=pl.BlockSpec((tm_s, f_pad), lambda i: (i, 0)),
        ),
        compiler_params=pltpu.CompilerParams(
            dimension_semantics=("parallel",),
            vmem_limit_bytes=vmem_limit),
    )(x_p, w_p)

    # Stage 2: output = relu(A @ support + bias), K-tiled row-slab stream.
    out_p = pl.pallas_call(
        _adj_matmul_kernel,
        out_shape=jax.ShapeDtypeStruct((n_pad, f_pad), jnp.float32),
        grid_spec=pltpu.PrefetchScalarGridSpec(
            num_scalar_prefetch=0,
            grid=(n_pad // tm, n_pad // tk),
            in_specs=[pl.BlockSpec((tm, tk), lambda i, k: (i, k)),     # adj block
                      pl.BlockSpec((tk, f_pad), lambda i, k: (k, 0)),  # support block
                      pl.BlockSpec((1, f_pad), lambda i, k: (0, 0))],  # bias
            out_specs=pl.BlockSpec((tm, f_pad), lambda i, k: (i, 0)),
            scratch_shapes=[pltpu.VMEM((tm, f_pad), jnp.float32)],
        ),
        compiler_params=pltpu.CompilerParams(
            dimension_semantics=("parallel", "arbitrary"),
            vmem_limit_bytes=vmem_limit),
    )(adj_p, support, b_p)

    return out_p[:n, :f_out].astype(x.dtype)


# --------------------------------------------------------------------------
# Demo / correctness check
# --------------------------------------------------------------------------
if __name__ == "__main__":
    key = jax.random.PRNGKey(0)
    k1, k2, k3, k4, k5, k6 = jax.random.split(key, 6)

    # ---- Case 1: module-consistent small graph (fused path, exact f32 math).
    N, F_IN, F_OUT = 64, 32, 16
    x = jax.random.normal(k1, (N, F_IN), dtype=jnp.float32)
    adj_raw = jax.random.uniform(k2, (N, N), dtype=jnp.float32)
    adj = adj_raw / jnp.sum(adj_raw, axis=1, keepdims=True)
    weight = jnp.ones((F_IN, F_OUT), dtype=jnp.float32)   # nn.init.constant_(w, 1)
    bias = jnp.zeros((F_OUT,), dtype=jnp.float32)          # nn.init.constant_(b, 0)

    out = jax.block_until_ready(gcn_conv_reg(x, adj, weight, bias, use_bf16=False))
    ref = jnp.maximum(adj @ (x @ weight) + bias, 0.0)
    assert out.shape == (N, F_OUT)
    assert jnp.allclose(out, ref, atol=1e-4, rtol=1e-4), \
        float(jnp.max(jnp.abs(out - ref)))

    # ---- Case 2: larger graph exercising the K-tiled streaming path (bf16 adj).
    N2, F_IN2, F_OUT2 = 1536, 64, 32
    x2 = jax.random.normal(k3, (N2, F_IN2), dtype=jnp.float32)
    adj2_raw = jax.random.uniform(k4, (N2, N2), dtype=jnp.float32)
    adj2 = adj2_raw / jnp.sum(adj2_raw, axis=1, keepdims=True)
    w2 = 0.2 * jax.random.normal(k5, (F_IN2, F_OUT2), dtype=jnp.float32)
    b2 = 0.1 * jax.random.normal(k6, (F_OUT2,), dtype=jnp.float32)

    out2 = jax.block_until_ready(gcn_conv_reg(x2, adj2, w2, b2, use_bf16=True))
    ref2 = jnp.maximum(adj2 @ (x2 @ w2) + b2, 0.0)
    assert out2.shape == (N2, F_OUT2)
    assert jnp.allclose(out2, ref2, atol=1e-2, rtol=1e-2), \
        float(jnp.max(jnp.abs(out2 - ref2)))

    print("KERNEL_OK")
</pallas_src>

<mosaic_0001>
module attributes {stable_mosaic.version = 11 : i64} {
  func.func @_fused_kernel(%arg0: memref<128x128xf32, #tpu.memory_space<vmem>>, %arg1: memref<128x128xf32, #tpu.memory_space<vmem>>, %arg2: memref<128x128xf32, #tpu.memory_space<vmem>>, %arg3: memref<1x128xf32, #tpu.memory_space<vmem>>, %arg4: memref<128x128xf32, #tpu.memory_space<vmem>>) attributes {dimension_semantics = [], scalar_prefetch = 0 : i64, scratch_operands = 0 : i64, tpu.core_type = #tpu.core_type<tc>} {
    %c0 = arith.constant 0 : index
    %c0_0 = arith.constant 0 : index
    %0 = vector.load %arg0[%c0, %c0_0] : memref<128x128xf32, #tpu.memory_space<vmem>>, vector<128x128xf32>
    %c0_1 = arith.constant 0 : index
    %c0_2 = arith.constant 0 : index
    %1 = vector.load %arg1[%c0_1, %c0_2] : memref<128x128xf32, #tpu.memory_space<vmem>>, vector<128x128xf32>
    %cst = arith.constant dense<0.000000e+00> : vector<128x128xf32>
    %2 = tpu.matmul %0, %1, %cst {dimension_numbers = #tpu.dot_dimension_numbers<[1], [0], [0], [1], [0, 0, 1, 1], [], []>} : vector<128x128xf32>, vector<128x128xf32>, vector<128x128xf32> -> vector<128x128xf32>
    %c0_3 = arith.constant 0 : index
    %c0_4 = arith.constant 0 : index
    %3 = vector.load %arg2[%c0_3, %c0_4] : memref<128x128xf32, #tpu.memory_space<vmem>>, vector<128x128xf32>
    %cst_5 = arith.constant dense<0.000000e+00> : vector<128x128xf32>
    %4 = tpu.matmul %3, %2, %cst_5 {dimension_numbers = #tpu.dot_dimension_numbers<[1], [0], [0], [1], [0, 0, 1, 1], [], []>} : vector<128x128xf32>, vector<128x128xf32>, vector<128x128xf32> -> vector<128x128xf32>
    %c0_6 = arith.constant 0 : index
    %c0_7 = arith.constant 0 : index
    %5 = vector.load %arg3[%c0_6, %c0_7] : memref<1x128xf32, #tpu.memory_space<vmem>>, vector<1x128xf32>
    %6 = vector.broadcast %5 : vector<1x128xf32> to vector<128x128xf32>
    %7 = arith.addf %4, %6 : vector<128x128xf32>
    %cst_8 = arith.constant 0.000000e+00 : f32
    %8 = vector.broadcast %cst_8 : f32 to vector<128x128xf32>
    %9 = arith.maximumf %7, %8 : vector<128x128xf32>
    %c0_9 = arith.constant 0 : index
    %c0_10 = arith.constant 0 : index
    %10 = vector.load %arg4[%c0_9, %c0_10] : memref<128x128xf32, #tpu.memory_space<vmem>>, vector<128x128xf32>
    tpu.vector_store %arg4[%c0_9, %c0_10], %9 {strides = array<i32>} : memref<128x128xf32, #tpu.memory_space<vmem>>, vector<128x128xf32>,
    return
  }
}

</mosaic_0001>

<llo_original>
// kernel: gcn_conv_reg.1
$region0: #{gcn_conv_reg.1}
  #allocation0 [shape = 'u32[]', space=smem, size = 0x4, offset = 0x4, fixed_abs, tag = 'smem constant byte address 0x4 - core index']
  #allocation1 [shape = 'u32[144,128]{1,0:T(1,128)}', space=vmem, size = 0x12000, scoped, tag = 'internal scratch']
  %s0 = inlined_call_operand.vmem [shape: f32[128,128], index: 0, kind: input, shape index: {}]
  %s1 = inlined_call_operand.vmem [shape: f32[128,128], index: 1, kind: input, shape index: {}]
  %s2 = inlined_call_operand.vmem [shape: f32[128,128], index: 2, kind: input, shape index: {}]
  %s3 = inlined_call_operand.vmem [shape: f32[1,128], index: 3, kind: input, shape index: {}]
  %s4 = inlined_call_operand.vmem [shape: f32[128,128], index: 4, kind: output, shape index: {}]
  %s5 = sld [smem:[#allocation0]]
  $region26: #{gcn_conv_reg.1} parent=0
    _
  %s7 = ssub.s32 1, %s5
  %s8 = scalar_select 0, %s7, %s5
  // Predicated region
  $region2: #{gcn_conv_reg.1} parent=0 // pred_check
    _
  $region3: #{gcn_conv_reg.1} parent=0 // pred_check_branch
    %10 = sbr.rel (0) target = $region5
  $region4: #{gcn_conv_reg.1} parent=0 // pred_region
    _
  $region5: #{gcn_conv_reg.1} parent=0 // pred_fallthru
    _
  // Predicated region
  $region6: #{gcn_conv_reg.1} parent=0 // pred_check
    _
  $region7: #{gcn_conv_reg.1} parent=0 // pred_check_branch
    %12 = sbr.rel (0) target = $region9
  $region8: #{gcn_conv_reg.1} parent=0 // pred_region
    _
  $region9: #{gcn_conv_reg.1} parent=0 // pred_fallthru
    _
  // Predicated region
  $region10: #{gcn_conv_reg.1} parent=0 // pred_check
    _
  $region11: #{gcn_conv_reg.1} parent=0 // pred_check_branch
    %14 = sbr.rel (0) target = $region13
  $region12: #{gcn_conv_reg.1} parent=0 // pred_region
    _
  $region13: #{gcn_conv_reg.1} parent=0 // pred_fallthru
    _
  // Predicated region
  $region14: #{gcn_conv_reg.1} parent=0 // pred_check
    _
  $region15: #{gcn_conv_reg.1} parent=0 // pred_check_branch
    %16 = sbr.rel (0) target = $region17
  $region16: #{gcn_conv_reg.1} parent=0 // pred_region
    _
  $region17: #{gcn_conv_reg.1} parent=0 // pred_fallthru
    _
  %v17 = vld [vmem:[%s0] sm:$0xff]
  %v18 = vld [vmem:[%s0 + $0x8] sm:$0xff]
  %v19 = vld [vmem:[%s0 + $0x10] sm:$0xff]
  %v20 = vld [vmem:[%s0 + $0x18] sm:$0xff]
  %v21 = vld [vmem:[%s0 + $0x20] sm:$0xff]
  %v22 = vld [vmem:[%s0 + $0x28] sm:$0xff]
  %v23 = vld [vmem:[%s0 + $0x30] sm:$0xff]
  %v24 = vld [vmem:[%s0 + $0x38] sm:$0xff]
  %v25 = vld [vmem:[%s0 + $0x40] sm:$0xff]
  %v26 = vld [vmem:[%s0 + $0x48] sm:$0xff]
  %v27 = vld [vmem:[%s0 + $0x50] sm:$0xff]
  %v28 = vld [vmem:[%s0 + $0x58] sm:$0xff]
  %v29 = vld [vmem:[%s0 + $0x60] sm:$0xff]
  %v30 = vld [vmem:[%s0 + $0x68] sm:$0xff]
  %v31 = vld [vmem:[%s0 + $0x70] sm:$0xff]
  %v32 = vld [vmem:[%s0 + $0x78] sm:$0xff]
  %v33 = vld [vmem:[%s1] sm:$0xff]
  %v34 = vld [vmem:[%s1 + $0x8] sm:$0xff]
  %v35 = vld [vmem:[%s1 + $0x10] sm:$0xff]
  %v36 = vld [vmem:[%s1 + $0x18] sm:$0xff]
  %v37 = vld [vmem:[%s1 + $0x20] sm:$0xff]
  %v38 = vld [vmem:[%s1 + $0x28] sm:$0xff]
  %v39 = vld [vmem:[%s1 + $0x30] sm:$0xff]
  %v40 = vld [vmem:[%s1 + $0x38] sm:$0xff]
  %v41 = vld [vmem:[%s1 + $0x40] sm:$0xff]
  %v42 = vld [vmem:[%s1 + $0x48] sm:$0xff]
  %v43 = vld [vmem:[%s1 + $0x50] sm:$0xff]
  %v44 = vld [vmem:[%s1 + $0x58] sm:$0xff]
  %v45 = vld [vmem:[%s1 + $0x60] sm:$0xff]
  %v46 = vld [vmem:[%s1 + $0x68] sm:$0xff]
  %v47 = vld [vmem:[%s1 + $0x70] sm:$0xff]
  %v48 = vld [vmem:[%s1 + $0x78] sm:$0xff]
  %49 = vmatprep.subr.mxu0 0.0
  %50 = vmatpush1.msra.mxu0 %v33
  %51 = vmatprep.subr.mxu0 0.0
  %52 = vmatpush1.msra.mxu0 %v34
  %53 = vmatprep.subr.mxu0 0.0
  %54 = vmatpush1.msra.mxu0 %v35
  %55 = vmatprep.subr.mxu0 0.0
  %56 = vmatpush1.msra.mxu0 %v36
  %57 = vmatprep.subr.mxu0 0.0
  %58 = vmatpush1.msra.mxu0 %v37
  %59 = vmatprep.subr.mxu0 0.0
  %60 = vmatpush1.msra.mxu0 %v38
  %61 = vmatprep.subr.mxu0 0.0
  %62 = vmatpush1.msra.mxu0 %v39
  %63 = vmatprep.subr.mxu0 0.0
  %64 = vmatpush1.msra.mxu0 %v40
  %65 = vmatprep.subr.mxu0 0.0
  %66 = vmatpush1.msra.mxu0 %v41
  %67 = vmatprep.subr.mxu0 0.0
  %68 = vmatpush1.msra.mxu0 %v42
  %69 = vmatprep.subr.mxu0 0.0
  %70 = vmatpush1.msra.mxu0 %v43
  %71 = vmatprep.subr.mxu0 0.0
  %72 = vmatpush1.msra.mxu0 %v44
  %73 = vmatprep.subr.mxu0 0.0
  %74 = vmatpush1.msra.mxu0 %v45
  %75 = vmatprep.subr.mxu0 0.0
  %76 = vmatpush1.msra.mxu0 %v46
  %77 = vmatprep.subr.mxu0 0.0
  %78 = vmatpush1.msra.mxu0 %v47
  %79 = vmatprep.subr.mxu0 0.0
  %80 = vmatpush1.msra.mxu0 %v48
  %81 = vmatprep.subr.mxu0 0.0
  %82 = vmatpush1.msra.mxu0 0.0
  %83 = vmatprep.subr.mxu0 0.0
  %84 = vmatpush1.msra.mxu0 0.0
  %85 = vmatprep.subr.mxu0 0.0
  %86 = vmatpush1.msra.mxu0 0.0
  %87 = vmatprep.subr.mxu0 0.0
  %88 = vmatpush1.msra.mxu0 0.0
  %89 = vmatprep.subr.mxu0 0.0
  %90 = vmatpush1.msra.mxu0 0.0
  %91 = vmatprep.subr.mxu0 0.0
  %92 = vmatpush1.msra.mxu0 0.0
  %93 = vmatprep.subr.mxu0 0.0
  %94 = vmatpush1.msra.mxu0 0.0
  %95 = vmatprep.subr.mxu0 0.0
  %96 = vmatpush1.msra.mxu0 0.0
  %97 = vmatprep.subr.mxu0 0.0
  %98 = vmatpush1.msra.mxu0 0.0
  %99 = vmatprep.subr.mxu0 0.0
  %100 = vmatpush1.msra.mxu0 0.0
  %101 = vmatprep.subr.mxu0 0.0
  %102 = vmatpush1.msra.mxu0 0.0
  %103 = vmatprep.subr.mxu0 0.0
  %104 = vmatpush1.msra.mxu0 0.0
  %105 = vmatprep.subr.mxu0 0.0
  %106 = vmatpush1.msra.mxu0 0.0
  %107 = vmatprep.subr.mxu0 0.0
  %108 = vmatpush1.msra.mxu0 0.0
  %109 = vmatprep.subr.mxu0 0.0
  %110 = vmatpush1.msra.mxu0 0.0
  %111 = vmatprep.subr.mxu0 0.0
  %112 = vmatpush1.msra.mxu0 0.0
  %113 = vmatprep.mubr.f32.mxu0 0.0
  %114 = vmatmul.mubr.f32.gmra.mrb[0].mxu0 %v17
  %v115 = vpop.f32.mrb[0].mxu0
  %v116 = vadd.f32 0.0, %v115
  %v117 = vpop.f32.mrb[0].mxu0
  %118 = vmatprep.mubr.f32.mxu0 0.0
  %119 = vmatmul.mubr.f32.gmra.mrb[0].mxu0 %v18
  %v120 = vpop.f32.mrb[0].mxu0
  %v121 = vadd.f32 0.0, %v120
  %v122 = vpop.f32.mrb[0].mxu0
  %123 = vmatprep.mubr.f32.mxu0 0.0
  %124 = vmatmul.mubr.f32.gmra.mrb[0].mxu0 %v19
  %v125 = vpop.f32.mrb[0].mxu0
  %v126 = vadd.f32 0.0, %v125
  %v127 = vpop.f32.mrb[0].mxu0
  %128 = vmatprep.mubr.f32.mxu0 0.0
  %129 = vmatmul.mubr.f32.gmra.mrb[0].mxu0 %v20
  %v130 = vpop.f32.mrb[0].mxu0
  %v131 = vadd.f32 0.0, %v130
  %v132 = vpop.f32.mrb[0].mxu0
  %133 = vmatprep.mubr.f32.mxu0 0.0
  %134 = vmatmul.mubr.f32.gmra.mrb[0].mxu0 %v21
  %v135 = vpop.f32.mrb[0].mxu0
  %v136 = vadd.f32 0.0, %v135
  %v137 = vpop.f32.mrb[0].mxu0
  %138 = vmatprep.mubr.f32.mxu0 0.0
  %139 = vmatmul.mubr.f32.gmra.mrb[0].mxu0 %v22
  %v140 = vpop.f32.mrb[0].mxu0
  %v141 = vadd.f32 0.0, %v140
  %v142 = vpop.f32.mrb[0].mxu0
  %143 = vmatprep.mubr.f32.mxu0 0.0
  %144 = vmatmul.mubr.f32.gmra.mrb[0].mxu0 %v23
  %v145 = vpop.f32.mrb[0].mxu0
  %v146 = vadd.f32 0.0, %v145
  %v147 = vpop.f32.mrb[0].mxu0
  %148 = vmatprep.mubr.f32.mxu0 0.0
  %149 = vmatmul.mubr.f32.gmra.mrb[0].mxu0 %v24
  %v150 = vpop.f32.mrb[0].mxu0
  %v151 = vadd.f32 0.0, %v150
  %v152 = vpop.f32.mrb[0].mxu0
  %153 = vmatprep.mubr.f32.mxu0 0.0
  %154 = vmatmul.mubr.f32.gmra.mrb[0].mxu0 %v25
  %v155 = vpop.f32.mrb[0].mxu0
  %v156 = vadd.f32 0.0, %v155
  %v157 = vpop.f32.mrb[0].mxu0
  %158 = vmatprep.mubr.f32.mxu0 0.0
  %159 = vmatmul.mubr.f32.gmra.mrb[0].mxu0 %v26
  %v160 = vpop.f32.mrb[0].mxu0
  %v161 = vadd.f32 0.0, %v160
  %v162 = vpop.f32.mrb[0].mxu0
  %163 = vmatprep.mubr.f32.mxu0 0.0
  %164 = vmatmul.mubr.f32.gmra.mrb[0].mxu0 %v27
  %v165 = vpop.f32.mrb[0].mxu0
  %v166 = vadd.f32 0.0, %v165
  %v167 = vpop.f32.mrb[0].mxu0
  %168 = vmatprep.mubr.f32.mxu0 0.0
  %169 = vmatmul.mubr.f32.gmra.mrb[0].mxu0 %v28
  %v170 = vpop.f32.mrb[0].mxu0
  %v171 = vadd.f32 0.0, %v170
  %v172 = vpop.f32.mrb[0].mxu0
  %173 = vmatprep.mubr.f32.mxu0 0.0
  %174 = vmatmul.mubr.f32.gmra.mrb[0].mxu0 %v29
  %v175 = vpop.f32.mrb[0].mxu0
  %v176 = vadd.f32 0.0, %v175
  %v177 = vpop.f32.mrb[0].mxu0
  %178 = vmatprep.mubr.f32.mxu0 0.0
  %179 = vmatmul.mubr.f32.gmra.mrb[0].mxu0 %v30
  %v180 = vpop.f32.mrb[0].mxu0
  %v181 = vadd.f32 0.0, %v180
  %v182 = vpop.f32.mrb[0].mxu0
  %183 = vmatprep.mubr.f32.mxu0 0.0
  %184 = vmatmul.mubr.f32.gmra.mrb[0].mxu0 %v31
  %v185 = vpop.f32.mrb[0].mxu0
  %v186 = vadd.f32 0.0, %v185
  %v187 = vpop.f32.mrb[0].mxu0
  %188 = vmatprep.mubr.f32.mxu0 0.0
  %189 = vmatmul.mubr.f32.gmra.mrb[0].mxu0 %v32
  %v190 = vpop.f32.mrb[0].mxu0
  %v191 = vadd.f32 0.0, %v190
  %v192 = vpop.f32.mrb[0].mxu0
  %193 = vdwg.mxu0
  %v194 = vld [vmem:[%s2] sm:$0xff]
  %v195 = vld [vmem:[%s2 + $0x8] sm:$0xff]
  %v196 = vld [vmem:[%s2 + $0x10] sm:$0xff]
  %v197 = vld [vmem:[%s2 + $0x18] sm:$0xff]
  %v198 = vld [vmem:[%s2 + $0x20] sm:$0xff]
  %v199 = vld [vmem:[%s2 + $0x28] sm:$0xff]
  %v200 = vld [vmem:[%s2 + $0x30] sm:$0xff]
  %v201 = vld [vmem:[%s2 + $0x38] sm:$0xff]
  %v202 = vld [vmem:[%s2 + $0x40] sm:$0xff]
  %v203 = vld [vmem:[%s2 + $0x48] sm:$0xff]
  %v204 = vld [vmem:[%s2 + $0x50] sm:$0xff]
  %v205 = vld [vmem:[%s2 + $0x58] sm:$0xff]
  %v206 = vld [vmem:[%s2 + $0x60] sm:$0xff]
  %v207 = vld [vmem:[%s2 + $0x68] sm:$0xff]
  %v208 = vld [vmem:[%s2 + $0x70] sm:$0xff]
  %v209 = vld [vmem:[%s2 + $0x78] sm:$0xff]
  %v210 = vld [vmem:[%s3] sm:$0x1]
  %v212 = vlaneseq
  %v213 = vshrl.u32 %v212, 7
  %v214 = vsub.s32 0, %v213
  %v215 = vrot.slane %v210, %v214
  %217 = vmatprep.subr.mxu0 0.0
  %218 = vmatpush1.msra.mxu0 %v116
  %219 = vmatprep.subr.mxu0 0.0
  %220 = vmatpush1.msra.mxu0 %v121
  %221 = vmatprep.subr.mxu0 0.0
  %222 = vmatpush1.msra.mxu0 %v126
  %223 = vmatprep.subr.mxu0 0.0
  %224 = vmatpush1.msra.mxu0 %v131
  %225 = vmatprep.subr.mxu0 0.0
  %226 = vmatpush1.msra.mxu0 %v136
  %227 = vmatprep.subr.mxu0 0.0
  %228 = vmatpush1.msra.mxu0 %v141
  %229 = vmatprep.subr.mxu0 0.0
  %230 = vmatpush1.msra.mxu0 %v146
  %231 = vmatprep.subr.mxu0 0.0
  %232 = vmatpush1.msra.mxu0 %v151
  %233 = vmatprep.subr.mxu0 0.0
  %234 = vmatpush1.msra.mxu0 %v156
  %235 = vmatprep.subr.mxu0 0.0
  %236 = vmatpush1.msra.mxu0 %v161
  %237 = vmatprep.subr.mxu0 0.0
  %238 = vmatpush1.msra.mxu0 %v166
  %239 = vmatprep.subr.mxu0 0.0
  %240 = vmatpush1.msra.mxu0 %v171
  %241 = vmatprep.subr.mxu0 0.0
  %242 = vmatpush1.msra.mxu0 %v176
  %243 = vmatprep.subr.mxu0 0.0
  %244 = vmatpush1.msra.mxu0 %v181
  %245 = vmatprep.subr.mxu0 0.0
  %246 = vmatpush1.msra.mxu0 %v186
  %247 = vmatprep.subr.mxu0 0.0
  %248 = vmatpush1.msra.mxu0 %v191
  %249 = vmatprep.subr.mxu0 0.0
  %250 = vmatpush1.msra.mxu0 0.0
  %251 = vmatprep.subr.mxu0 0.0
  %252 = vmatpush1.msra.mxu0 0.0
  %253 = vmatprep.subr.mxu0 0.0
  %254 = vmatpush1.msra.mxu0 0.0
  %255 = vmatprep.subr.mxu0 0.0
  %256 = vmatpush1.msra.mxu0 0.0
  %257 = vmatprep.subr.mxu0 0.0
  %258 = vmatpush1.msra.mxu0 0.0
  %259 = vmatprep.subr.mxu0 0.0
  %260 = vmatpush1.msra.mxu0 0.0
  %261 = vmatprep.subr.mxu0 0.0
  %262 = vmatpush1.msra.mxu0 0.0
  %263 = vmatprep.subr.mxu0 0.0
  %264 = vmatpush1.msra.mxu0 0.0
  %265 = vmatprep.subr.mxu0 0.0
  %266 = vmatpush1.msra.mxu0 0.0
  %267 = vmatprep.subr.mxu0 0.0
  %268 = vmatpush1.msra.mxu0 0.0
  %269 = vmatprep.subr.mxu0 0.0
  %270 = vmatpush1.msra.mxu0 0.0
  %271 = vmatprep.subr.mxu0 0.0
  %272 = vmatpush1.msra.mxu0 0.0
  %273 = vmatprep.subr.mxu0 0.0
  %274 = vmatpush1.msra.mxu0 0.0
  %275 = vmatprep.subr.mxu0 0.0
  %276 = vmatpush1.msra.mxu0 0.0
  %277 = vmatprep.subr.mxu0 0.0
  %278 = vmatpush1.msra.mxu0 0.0
  %279 = vmatprep.subr.mxu0 0.0
  %280 = vmatpush1.msra.mxu0 0.0
  %281 = vmatprep.mubr.f32.mxu0 0.0
  %282 = vmatmul.mubr.f32.gmra.mrb[0].mxu0 %v194
  %v283 = vpop.f32.mrb[0].mxu0
  %v284 = vadd.f32 %v215, %v283
  %v285 = vpop.f32.mrb[0].mxu0
  %286 = vmatprep.mubr.f32.mxu0 0.0
  %287 = vmatmul.mubr.f32.gmra.mrb[0].mxu0 %v195
  %v288 = vpop.f32.mrb[0].mxu0
  %v289 = vadd.f32 %v215, %v288
  %v290 = vpop.f32.mrb[0].mxu0
  %291 = vmatprep.mubr.f32.mxu0 0.0
  %292 = vmatmul.mubr.f32.gmra.mrb[0].mxu0 %v196
  %v293 = vpop.f32.mrb[0].mxu0
  %v294 = vadd.f32 %v215, %v293
  %v295 = vpop.f32.mrb[0].mxu0
  %296 = vmatprep.mubr.f32.mxu0 0.0
  %297 = vmatmul.mubr.f32.gmra.mrb[0].mxu0 %v197
  %v298 = vpop.f32.mrb[0].mxu0
  %v299 = vadd.f32 %v215, %v298
  %v300 = vpop.f32.mrb[0].mxu0
  %301 = vmatprep.mubr.f32.mxu0 0.0
  %302 = vmatmul.mubr.f32.gmra.mrb[0].mxu0 %v198
  %v303 = vpop.f32.mrb[0].mxu0
  %v304 = vadd.f32 %v215, %v303
  %v305 = vpop.f32.mrb[0].mxu0
  %306 = vmatprep.mubr.f32.mxu0 0.0
  %307 = vmatmul.mubr.f32.gmra.mrb[0].mxu0 %v199
  %v308 = vpop.f32.mrb[0].mxu0
  %v309 = vadd.f32 %v215, %v308
  %v310 = vpop.f32.mrb[0].mxu0
  %311 = vmatprep.mubr.f32.mxu0 0.0
  %312 = vmatmul.mubr.f32.gmra.mrb[0].mxu0 %v200
  %v313 = vpop.f32.mrb[0].mxu0
  %v314 = vadd.f32 %v215, %v313
  %v315 = vpop.f32.mrb[0].mxu0
  %316 = vmatprep.mubr.f32.mxu0 0.0
  %317 = vmatmul.mubr.f32.gmra.mrb[0].mxu0 %v201
  %v318 = vpop.f32.mrb[0].mxu0
  %v319 = vadd.f32 %v215, %v318
  %v320 = vpop.f32.mrb[0].mxu0
  %321 = vmatprep.mubr.f32.mxu0 0.0
  %322 = vmatmul.mubr.f32.gmra.mrb[0].mxu0 %v202
  %v323 = vpop.f32.mrb[0].mxu0
  %v324 = vadd.f32 %v215, %v323
  %v325 = vpop.f32.mrb[0].mxu0
  %326 = vmatprep.mubr.f32.mxu0 0.0
  %327 = vmatmul.mubr.f32.gmra.mrb[0].mxu0 %v203
  %v328 = vpop.f32.mrb[0].mxu0
  %v329 = vadd.f32 %v215, %v328
  %v330 = vpop.f32.mrb[0].mxu0
  %331 = vmatprep.mubr.f32.mxu0 0.0
  %332 = vmatmul.mubr.f32.gmra.mrb[0].mxu0 %v204
  %v333 = vpop.f32.mrb[0].mxu0
  %v334 = vadd.f32 %v215, %v333
  %v335 = vpop.f32.mrb[0].mxu0
  %336 = vmatprep.mubr.f32.mxu0 0.0
  %337 = vmatmul.mubr.f32.gmra.mrb[0].mxu0 %v205
  %v338 = vpop.f32.mrb[0].mxu0
  %v339 = vadd.f32 %v215, %v338
  %v340 = vpop.f32.mrb[0].mxu0
  %341 = vmatprep.mubr.f32.mxu0 0.0
  %342 = vmatmul.mubr.f32.gmra.mrb[0].mxu0 %v206
  %v343 = vpop.f32.mrb[0].mxu0
  %v344 = vadd.f32 %v215, %v343
  %v345 = vpop.f32.mrb[0].mxu0
  %346 = vmatprep.mubr.f32.mxu0 0.0
  %347 = vmatmul.mubr.f32.gmra.mrb[0].mxu0 %v207
  %v348 = vpop.f32.mrb[0].mxu0
  %v349 = vadd.f32 %v215, %v348
  %v350 = vpop.f32.mrb[0].mxu0
  %351 = vmatprep.mubr.f32.mxu0 0.0
  %352 = vmatmul.mubr.f32.gmra.mrb[0].mxu0 %v208
  %v353 = vpop.f32.mrb[0].mxu0
  %v354 = vadd.f32 %v215, %v353
  %v355 = vpop.f32.mrb[0].mxu0
  %356 = vmatprep.mubr.f32.mxu0 0.0
  %357 = vmatmul.mubr.f32.gmra.mrb[0].mxu0 %v209
  %v358 = vpop.f32.mrb[0].mxu0
  %v359 = vadd.f32 %v215, %v358
  %v360 = vpop.f32.mrb[0].mxu0
  %361 = vdwg.mxu0
  %v362 = vmax.f32 %v284, 0.0
  %v363 = vmax.f32 %v289, 0.0
  %v364 = vmax.f32 %v294, 0.0
  %v365 = vmax.f32 %v299, 0.0
  %v366 = vmax.f32 %v304, 0.0
  %v367 = vmax.f32 %v309, 0.0
  %v368 = vmax.f32 %v314, 0.0
  %v369 = vmax.f32 %v319, 0.0
  %v370 = vmax.f32 %v324, 0.0
  %v371 = vmax.f32 %v329, 0.0
  %v372 = vmax.f32 %v334, 0.0
  %v373 = vmax.f32 %v339, 0.0
  %v374 = vmax.f32 %v344, 0.0
  %v375 = vmax.f32 %v349, 0.0
  %v376 = vmax.f32 %v354, 0.0
  %v377 = vmax.f32 %v359, 0.0
  %378 = vst [vmem:[%s4] sm:$0xff] %v362
  %379 = vst [vmem:[%s4 + $0x8] sm:$0xff] %v363
  %380 = vst [vmem:[%s4 + $0x10] sm:$0xff] %v364
  %381 = vst [vmem:[%s4 + $0x18] sm:$0xff] %v365
  %382 = vst [vmem:[%s4 + $0x20] sm:$0xff] %v366
  %383 = vst [vmem:[%s4 + $0x28] sm:$0xff] %v367
  %384 = vst [vmem:[%s4 + $0x30] sm:$0xff] %v368
  %385 = vst [vmem:[%s4 + $0x38] sm:$0xff] %v369
  %386 = vst [vmem:[%s4 + $0x40] sm:$0xff] %v370
  %387 = vst [vmem:[%s4 + $0x48] sm:$0xff] %v371
  %388 = vst [vmem:[%s4 + $0x50] sm:$0xff] %v372
  %389 = vst [vmem:[%s4 + $0x58] sm:$0xff] %v373
  %390 = vst [vmem:[%s4 + $0x60] sm:$0xff] %v374
  %391 = vst [vmem:[%s4 + $0x68] sm:$0xff] %v375
  %392 = vst [vmem:[%s4 + $0x70] sm:$0xff] %v376
  %393 = vst [vmem:[%s4 + $0x78] sm:$0xff] %v377
  // Predicated region
  $region18: #{gcn_conv_reg.1} parent=0 // pred_check
    _
  $region19: #{gcn_conv_reg.1} parent=0 // pred_check_branch
    %395 = sbr.rel (0) target = $region21
  $region20: #{gcn_conv_reg.1} parent=0 // pred_region
    _
  $region21: #{gcn_conv_reg.1} parent=0 // pred_fallthru
    _
  // Predicated region
  $region22: #{gcn_conv_reg.1} parent=0 // pred_check
    _
  $region23: #{gcn_conv_reg.1} parent=0 // pred_check_branch
    %397 = sbr.rel (0) target = $region25
  $region24: #{gcn_conv_reg.1} parent=0 // pred_region
    _
  $region25: #{gcn_conv_reg.1} parent=0 // pred_fallthru
    _

</llo_original>
